<compile_context>
chip_gen: v7x
topology: tpu7x:2x2x1
jax: 0.10.0
libtpu: 0.0.40
codegen_flags: <defaults>
</compile_context>

<pallas_src>
import dataclasses
import functools

import jax
import jax.numpy as jnp
import numpy as np
from jax.experimental import pallas as pl
from jax.experimental.pallas import tpu as pltpu


@dataclasses.dataclass
class RWKVConfig:
    number_of_layers: int = 8
    hidden_size: int = 128
    k_clamp: int = 60
    ctx_len: int = 32
    k_eps: float = 1e-08
    vocab_size: int = 32000
    eps: float = 1e-05


# ----------------------------------------------------------------------------
# Kernel
# ----------------------------------------------------------------------------
def _rwkv_tm_kernel(x_ref, mask_ref, w_ref, wo_ref, out_ref, *, hidden, k_eps):
    C = hidden
    # x tile: whole sequences, any dtype -> f32 for the shift/elementwise path.
    x = x_ref[...].astype(jnp.float32)                      # (TM, C)

    # time_shift = ZeroPad2d((0, 0, 1, -1)): xx[t] = x[t-1], xx[0] = 0.
    # Rows at sequence starts (row % T == 0) are zeroed via the precomputed
    # (TM, 1) mask (identical for every tile since tiles hold whole sequences).
    xx = pltpu.roll(x, shift=1, axis=0) * mask_ref[...]     # (TM, C)

    # Single fused projection: [x | xx] @ W, W is (2C, 3C) bf16 with the
    # time-mix coefficients AND the decay vector `we` (k columns) pre-folded.
    # K = 2C fills the 256-deep MXU on v6e/v7x; f32 accumulation.
    xin = jnp.concatenate([x, xx], axis=1).astype(jnp.bfloat16)   # (TM, 2C)
    y = jnp.dot(xin, w_ref[...], preferred_element_type=jnp.float32)  # (TM, 3C)

    kw = y[:, :C]              # == k * we  (depthwise k=1 "conv" folded host-side)
    v = y[:, C:2 * C]
    r = y[:, 2 * C:]

    # rwkv = sigmoid(r) * (wkv / wk) = sigmoid(r) * ((k*we*v) / (k*we + eps))
    rwkv = jax.nn.sigmoid(r) * ((kw * v) / (kw + k_eps))

    out_ref[...] = jnp.dot(rwkv.astype(jnp.bfloat16), wo_ref[...],
                           preferred_element_type=jnp.float32
                           ).astype(out_ref.dtype)


# ----------------------------------------------------------------------------
# Tiling heuristic
# ----------------------------------------------------------------------------
def _choose_block_rows(B, T, C, x_bytes, *, min_grid=4, tile_bytes=6 << 20):
    """Sequences per tile: whole sequences only, ~tile_bytes of live VMEM per
    tile, and (when possible) at least `min_grid` grid steps so megacore
    sharding (v7x) and double-buffer pipelining both have work."""
    M = B * T
    # Rough live bytes per row inside the kernel: double-buffered x/out tiles,
    # f32 x/xx temporaries, bf16 [x|xx] operand, f32 (., 3C) projection,
    # elementwise temporaries.
    per_row = C * (4 * x_bytes + 2 * 4 + 2 * 2 + 3 * 4 + 3 * 4)
    target_rows = max(8, int(tile_bytes // per_row))

    cands = [tb for tb in range(1, B + 1)
             if B % tb == 0 and ((tb * T) % 8 == 0 or tb * T == M)]
    best = None
    for tb in sorted(cands):
        tm = tb * T
        if tm <= target_rows and (M // tm) >= min_grid:
            best = tb                      # largest tile that keeps grid >= min_grid
    if best is not None:
        return best
    small = [tb for tb in cands if tb * T <= target_rows]
    return min(small) if small else min(cands)


# ----------------------------------------------------------------------------
# Wrapper
# ----------------------------------------------------------------------------
def rwkv_tm_forward(x, fused, *, k_eps=1e-8, min_grid=4):
    B, T, C = x.shape
    M = B * T
    x_bytes = jnp.dtype(x.dtype).itemsize
    TB = _choose_block_rows(B, T, C, x_bytes, min_grid=min_grid)
    TM = TB * T
    grid = (M // TM,)

    xm = x.reshape(M, C)
    # Sequence-start mask for the roll-based time shift (same for every tile).
    mask = (jnp.arange(TM, dtype=jnp.int32) % T != 0).astype(jnp.float32)
    mask = mask.reshape(TM, 1)

    kernel = functools.partial(_rwkv_tm_kernel, hidden=C, k_eps=k_eps)

    # VMEM budget: double-buffered x/out tiles + resident bf16 weights + the
    # f32 intermediates (xx, [x|xx], y, elementwise temps).  Cap at 48 MiB so
    # there is headroom on v7x (64 MiB physical per TC).
    f32, bf16 = 4, 2
    est = 2 * TM * C * x_bytes            # x tiles (double-buffered)
    est += 2 * TM * C * x_bytes           # out tiles (double-buffered)
    est += 2 * TM * f32                   # mask (grid-invariant)
    est += 2 * (2 * C) * (3 * C) * bf16   # fused projection weight (resident)
    est += 2 * C * C * bf16               # w_o (resident)
    est += 2 * TM * C * f32               # x / xx f32 temporaries
    est += TM * (2 * C) * bf16            # [x|xx] bf16 matmul operand
    est += TM * (3 * C) * f32             # y (f32 accumulation)
    est += 3 * TM * C * f32               # elementwise temporaries
    vmem_limit = int(min(max(2 * est, 32 << 20), 48 << 20))

    out = pl.pallas_call(
        kernel,
        out_shape=jax.ShapeDtypeStruct((M, C), x.dtype),
        grid=grid,
        in_specs=[
            pl.BlockSpec((TM, C), lambda i: (i, 0)),            # x rows
            pl.BlockSpec((TM, 1), lambda i: (0, 0)),            # seq-start mask
            pl.BlockSpec((2 * C, 3 * C), lambda i: (0, 0)),     # fused W (resident)
            pl.BlockSpec((C, C), lambda i: (0, 0)),             # W_o (resident)
        ],
        out_specs=pl.BlockSpec((TM, C), lambda i: (i, 0)),
        compiler_params=pltpu.CompilerParams(
            dimension_semantics=("parallel",),                  # megacore on v7x
            vmem_limit_bytes=vmem_limit),
    )(xm, mask, fused["w"], fused["w_o"])

    return out.reshape(B, T, C)


# ----------------------------------------------------------------------------
# Parameters (module-equivalent init) + host-side weight fusion
# ----------------------------------------------------------------------------
def init_params(config: RWKVConfig, index: int, key):
    H = config.hidden_size
    layers = config.number_of_layers
    ratio_0_to_1 = index / (layers - 1)
    ratio_1_to_pz = 1.0 - index / layers

    i = jnp.arange(H, dtype=jnp.float32)
    decay_speed = (i / (H - 1)) ** (0.5 + 1.3 * ratio_0_to_1)        # == self.we
    x_init = i / H
    time_mix_k = x_init ** ratio_1_to_pz
    time_mix_v = x_init ** ratio_1_to_pz + 0.3 * ratio_0_to_1
    time_mix_r = x_init ** (0.5 * ratio_1_to_pz)

    k1, k2, k3, k4 = jax.random.split(key, 4)
    scale = 1.0 / (H ** 0.5)
    # Stored as (in, out) == PyTorch nn.Linear weight transposed.
    w_k = jax.random.normal(k1, (H, H), jnp.float32) * scale
    w_v = jax.random.normal(k2, (H, H), jnp.float32) * scale
    w_r = jax.random.normal(k3, (H, H), jnp.float32) * scale
    w_o = jax.random.normal(k4, (H, H), jnp.float32) * scale

    return {
        "we": decay_speed.reshape(1, H),
        "time_mix_k": time_mix_k.reshape(1, H),
        "time_mix_v": time_mix_v.reshape(1, H),
        "time_mix_r": time_mix_r.reshape(1, H),
        "w_k": w_k, "w_v": w_v, "w_r": w_r, "w_o": w_o,
    }


def fuse_params(params, weight_dtype=jnp.bfloat16):
    """Fold time-mix coefficients + decay `we` into the weights, concat the
    k|v|r projections along the output dim, and stack the x-path over the
    xx-path -> one (2C, 3C) matrix for a single K=2C matmul."""
    tmk = params["time_mix_k"].reshape(-1, 1)
    tmv = params["time_mix_v"].reshape(-1, 1)
    tmr = params["time_mix_r"].reshape(-1, 1)
    we = params["we"].reshape(1, -1)
    wk = params["w_k"] * we                       # fold decay into k output columns
    wv, wr = params["w_v"], params["w_r"]
    w_x = jnp.concatenate([tmk * wk, tmv * wv, tmr * wr], axis=1)              # x path
    w_xx = jnp.concatenate([(1 - tmk) * wk, (1 - tmv) * wv, (1 - tmr) * wr], axis=1)
    w = jnp.concatenate([w_x, w_xx], axis=0)      # (2C, 3C)
    return {
        "w": w.astype(weight_dtype),
        "w_o": params["w_o"].astype(weight_dtype),
    }


# ----------------------------------------------------------------------------
# Pure-jnp reference (mirrors the kernel's fused weights / bf16 matmul precision)
# ----------------------------------------------------------------------------
def rwkv_tm_reference(x, fused, k_eps=1e-8):
    B, T, C = x.shape
    x32 = x.astype(jnp.float32)
    xx = jnp.concatenate([jnp.zeros_like(x32[:, :1]), x32[:, :-1]], axis=1)
    xin = jnp.concatenate([x32.reshape(-1, C), xx.reshape(-1, C)],
                          axis=1).astype(jnp.bfloat16)
    y = jnp.dot(xin, fused["w"], preferred_element_type=jnp.float32)
    kw, v, r = y[:, :C], y[:, C:2 * C], y[:, 2 * C:]
    rwkv = jax.nn.sigmoid(r) * ((kw * v) / (kw + k_eps))
    out = jnp.dot(rwkv.astype(jnp.bfloat16), fused["w_o"],
                  preferred_element_type=jnp.float32)
    return out.reshape(B, T, C).astype(x.dtype)


if __name__ == "__main__":
    cfg = RWKVConfig(number_of_layers=8, hidden_size=128, ctx_len=32)
    B, T, C = 8, cfg.ctx_len, cfg.hidden_size     # M = 256 rows -> grid=(4,), TM=64
    layer_index = 3

    key = jax.random.PRNGKey(0)
    kx, kp = jax.random.split(key)
    # bf16 activations in / out (kernel is HBM-bandwidth-bound); math stays f32.
    x = jax.random.normal(kx, (B, T, C), jnp.float32).astype(jnp.bfloat16)
    params = init_params(cfg, layer_index, kp)
    fused = fuse_params(params)

    out = jax.block_until_ready(rwkv_tm_forward(x, fused, k_eps=cfg.k_eps))
    assert out.shape == (B, T, C)
    assert bool(jnp.all(jnp.isfinite(out.astype(jnp.float32))))

    ref = rwkv_tm_reference(x, fused, k_eps=cfg.k_eps)
    np.testing.assert_allclose(np.asarray(out.astype(jnp.float32)),
                               np.asarray(ref.astype(jnp.float32)),
                               rtol=2e-2, atol=2e-2)
    print("KERNEL_OK")
</pallas_src>

<mosaic_0001>
module attributes {stable_mosaic.version = 11 : i64} {
  func.func @_rwkv_tm_kernel(%arg0: i32, %arg1: memref<64x128xbf16, #tpu.memory_space<vmem>>, %arg2: memref<64x1xf32, #tpu.memory_space<vmem>>, %arg3: memref<256x384xbf16, #tpu.memory_space<vmem>>, %arg4: memref<128x128xbf16, #tpu.memory_space<vmem>>, %arg5: memref<64x128xbf16, #tpu.memory_space<vmem>>) attributes {dimension_semantics = [#tpu.dimension_semantics<parallel>], iteration_bounds = array<i64: 4>, scalar_prefetch = 0 : i64, scratch_operands = 0 : i64, tpu.core_type = #tpu.core_type<tc>, window_params = [{transform_indices = @transform_0, window_bounds = array<i64: 64, 128>}, {pipeline_mode = #tpu.pipeline_mode<synchronous>, transform_indices = @transform_1, window_bounds = array<i64: 64, 1>}, {pipeline_mode = #tpu.pipeline_mode<synchronous>, transform_indices = @transform_2, window_bounds = array<i64: 256, 384>}, {pipeline_mode = #tpu.pipeline_mode<synchronous>, transform_indices = @transform_3, window_bounds = array<i64: 128, 128>}, {transform_indices = @transform_4, window_bounds = array<i64: 64, 128>}]} {
    %c0 = arith.constant 0 : index
    %c0_0 = arith.constant 0 : index
    %0 = vector.load %arg1[%c0, %c0_0] : memref<64x128xbf16, #tpu.memory_space<vmem>>, vector<64x128xbf16>
    %1 = arith.extf %0 : vector<64x128xbf16> to vector<64x128xf32>
    %c1_i32 = arith.constant 1 : i32
    %2 = tpu.dynamic_rotate %1 by %c1_i32 dim 0 : vector<64x128xf32>, i32 -> vector<64x128xf32>
    %c0_1 = arith.constant 0 : index
    %c0_2 = arith.constant 0 : index
    %3 = vector.load %arg2[%c0_1, %c0_2] : memref<64x1xf32, #tpu.memory_space<vmem>>, vector<64x1xf32>
    %4 = vector.broadcast %3 : vector<64x1xf32> to vector<64x128xf32>
    %5 = arith.mulf %2, %4 : vector<64x128xf32>
    %6 = tpu.concatenate %1, %5 in 1 : vector<64x128xf32>, vector<64x128xf32> -> vector<64x256xf32>
    %7 = arith.truncf %6 : vector<64x256xf32> to vector<64x256xbf16>
    %c0_3 = arith.constant 0 : index
    %c0_4 = arith.constant 0 : index
    %8 = vector.load %arg3[%c0_3, %c0_4] : memref<256x384xbf16, #tpu.memory_space<vmem>>, vector<256x384xbf16>
    %cst = arith.constant dense<0.000000e+00> : vector<64x384xf32>
    %9 = tpu.matmul %7, %8, %cst {dimension_numbers = #tpu.dot_dimension_numbers<[1], [0], [0], [1], [0, 0, 1, 1], [], []>} : vector<64x256xbf16>, vector<256x384xbf16>, vector<64x384xf32> -> vector<64x384xf32>
    %10 = vector.extract_strided_slice %9 {offsets = [0, 0], sizes = [64, 128], strides = [1, 1]} : vector<64x384xf32> to vector<64x128xf32>
    %11 = vector.extract_strided_slice %9 {offsets = [0, 128], sizes = [64, 128], strides = [1, 1]} : vector<64x384xf32> to vector<64x128xf32>
    %12 = vector.extract_strided_slice %9 {offsets = [0, 256], sizes = [64, 128], strides = [1, 1]} : vector<64x384xf32> to vector<64x128xf32>
    %13 = arith.negf %12 : vector<64x128xf32>
    %14 = math.exp %13 : vector<64x128xf32>
    %cst_5 = arith.constant 1.000000e+00 : f32
    %15 = vector.broadcast %cst_5 : f32 to vector<64x128xf32>
    %16 = arith.addf %15, %14 : vector<64x128xf32>
    %17 = arith.divf %15, %16 : vector<64x128xf32>
    %18 = arith.mulf %10, %11 : vector<64x128xf32>
    %cst_6 = arith.constant 9.99999993E-9 : f32
    %19 = vector.broadcast %cst_6 : f32 to vector<64x128xf32>
    %20 = arith.addf %10, %19 : vector<64x128xf32>
    %21 = arith.divf %18, %20 : vector<64x128xf32>
    %22 = arith.mulf %17, %21 : vector<64x128xf32>
    %23 = arith.truncf %22 : vector<64x128xf32> to vector<64x128xbf16>
    %c0_7 = arith.constant 0 : index
    %c0_8 = arith.constant 0 : index
    %24 = vector.load %arg4[%c0_7, %c0_8] : memref<128x128xbf16, #tpu.memory_space<vmem>>, vector<128x128xbf16>
    %cst_9 = arith.constant dense<0.000000e+00> : vector<64x128xf32>
    %25 = tpu.matmul %23, %24, %cst_9 {dimension_numbers = #tpu.dot_dimension_numbers<[1], [0], [0], [1], [0, 0, 1, 1], [], []>} : vector<64x128xbf16>, vector<128x128xbf16>, vector<64x128xf32> -> vector<64x128xf32>
    %26 = arith.truncf %25 : vector<64x128xf32> to vector<64x128xbf16>
    %c0_10 = arith.constant 0 : index
    %c0_11 = arith.constant 0 : index
    %27 = vector.load %arg5[%c0_10, %c0_11] : memref<64x128xbf16, #tpu.memory_space<vmem>>, vector<64x128xbf16>
    tpu.vector_store %arg5[%c0_10, %c0_11], %26 {strides = array<i32>} : memref<64x128xbf16, #tpu.memory_space<vmem>>, vector<64x128xbf16>,
    return
  }
  func.func @transform_0(%arg0: i32) -> (i32, i32) {
    %c0_i32 = arith.constant 0 : i32
    %c0_i32_0 = arith.constant 0 : i32
    return %arg0, %c0_i32 : i32, i32
  }
  func.func @transform_1(%arg0: i32) -> (i32, i32) {
    %c0_i32 = arith.constant 0 : i32
    %c0_i32_0 = arith.constant 0 : i32
    %c0_i32_1 = arith.constant 0 : i32
    return %c0_i32, %c0_i32_0 : i32, i32
  }
  func.func @transform_2(%arg0: i32) -> (i32, i32) {
    %c0_i32 = arith.constant 0 : i32
    %c0_i32_0 = arith.constant 0 : i32
    %c0_i32_1 = arith.constant 0 : i32
    return %c0_i32, %c0_i32_0 : i32, i32
  }
  func.func @transform_3(%arg0: i32) -> (i32, i32) {
    %c0_i32 = arith.constant 0 : i32
    %c0_i32_0 = arith.constant 0 : i32
    %c0_i32_1 = arith.constant 0 : i32
    return %c0_i32, %c0_i32_0 : i32, i32
  }
  func.func @transform_4(%arg0: i32) -> (i32, i32) {
    %c0_i32 = arith.constant 0 : i32
    %c0_i32_0 = arith.constant 0 : i32
    return %arg0, %c0_i32 : i32, i32
  }
}

</mosaic_0001>

<llo_original>
// kernel: tpu_custom_call.1
$region0: #{tpu_custom_call.1}
  #allocation0 [shape = 'u32[]', space=smem, size = 0x4, offset = 0x4, fixed_abs, tag = 'smem constant byte address 0x4 - core index']
  #allocation1 [shape = 'u32[144,128]{1,0:T(1,128)}', space=vmem, size = 0x12000, scoped, tag = 'internal scratch']
  %s0 = inlined_call_operand.hbm [shape: bf16[256,128], index: 0, kind: input, shape index: {}]
  %s1 = inlined_call_operand.vmem [shape: f32[64,1], index: 1, kind: input, shape index: {}]
  %s2 = inlined_call_operand.hbm [shape: bf16[256,384], index: 2, kind: input, shape index: {}]
  %s3 = inlined_call_operand.vmem [shape: bf16[128,128], index: 3, kind: input, shape index: {}]
  %s4 = inlined_call_operand.hbm [shape: bf16[256,128], index: 4, kind: output, shape index: {}]
  %s5 = sld [smem:[#allocation0]]
  $region57: #{tpu_custom_call.1} parent=0
    _
  %s7 = ssub.s32 1, %s5
  %s8 = scalar_select 0, %s7, %s5
  $region1: #{tpu_custom_call.1} parent=0
    #allocation2 [shape = 'u8[32768]{0}', space=vmem, size = 0x8000, scoped, tag = 'input window, operand 0']
    #allocation3 [shape = 's32[2]{0}', space=sflag, size = 0x8, scoped, tag = 'scoped memory for tpu_custom_call.1']
    #allocation4 [shape = 's32[2]{0}', space=sflag, size = 0x8, scoped, tag = 'scoped memory for tpu_custom_call.1']
    #allocation5 [shape = 'u8[196608]{0}', space=vmem, size = 0x30000, scoped, tag = 'input window, operand 2, single buffered']
    #allocation6 [shape = 's32[1]{0}', space=sflag, size = 0x4, scoped, tag = 'scoped memory for tpu_custom_call.1']
    #allocation7 [shape = 'u8[32768]{0}', space=vmem, size = 0x8000, scoped, tag = 'output window, operand 0']
    %9 = vsyncpa [#allocation3], 0
    %s10 = scalar_lea.sflag [#allocation3], 1
    %11 = vsyncpa %s10, 0
    %12 = vsyncpa [#allocation6], 0
    %13 = vsyncpa [#allocation4], 0
    %s14 = scalar_lea.sflag [#allocation4], 1
    %15 = vsyncpa %s14, 0
    loop: start=0, step=1, limit=6
    $region2: #{tpu_custom_call.1} parent=1 // loop_pre_header
      _
    $region3: #{tpu_custom_call.1} parent=1 // loop_header
      %s17 = sphi 0, %s21
      %p18 = scmp.ge.s32.totalorder %s17, 6
      %s27 = sphi 0, %s29
      %s30 = sphi 0, %s27
      %s31 = sphi 0, %s30
      %s47 = sphi 0, %s31
      %s51 = sphi 0, %s51
      %s53 = sphi 0, %s51
      %s54 = sphi 0, %s53
      %s68 = sphi 0, %s54
      %s72 = sphi 0, %s72
      %s74 = sphi 0, %s72
      %s75 = sphi 0, %s74
      %s89 = sphi 0, %s75
      %s93 = sphi 0, %s93
      %s95 = sphi 0, %s93
      %s96 = sphi 0, %s95
      %s110 = sphi 0, %s96
      %s116 = sphi 0, %s118
      %s119 = sphi 0, %s116
      %s120 = sphi 0, %s119
      %s136 = sphi 0, %s120
    $region4: #{tpu_custom_call.1} parent=1 // loop_header_branch
      %20 = sbr.rel (%p18) target = $region8
    $region5: #{tpu_custom_call.1} parent=1 // loop_body
      %s22 = ssub.s32 %s17, 1
      %s23 = ssub.s32 %s17, 2
      %s24 = sadd.s32 %s17, 1
      %s25 = ssub.s32 %s17, %s24
      %p26 = scmp.eq.s32.totalorder %s25, 0
      %s28 = sadd.s32 %s27, 1
      %s29 = scalar_select %p26, %s27, %s28
      %p32 = pneg %p26
      %p33 = scmp.eq.s32.totalorder %s17, 3
      %p34 = por %p32, %p33
      %p35 = scmp.ne.s32.totalorder %s27, %s30
      %p36 = scmp.eq.s32.totalorder %s17, 0
      %p37 = por %p35, %p36
      %p38 = scmp.ne.s32.totalorder %s27, %s30
      %p39 = scmp.eq.s32.totalorder %s22, 3
      %p40 = por %p38, %p39
      %p41 = scmp.ne.s32.totalorder %s30, %s31
      %p42 = scmp.eq.s32.totalorder %s22, 0
      %p43 = por %p41, %p42
      %p44 = scmp.ne.s32.totalorder %s30, %s31
      %p45 = scmp.eq.s32.totalorder %s23, 3
      %p46 = por %p44, %p45
      %p48 = scmp.ne.s32.totalorder %s31, %s47
      %p49 = scmp.eq.s32.totalorder %s23, 0
      %p50 = por %p48, %p49
      %s52 = sadd.s32 %s51, 1
      %p55 = scmp.eq.s32.totalorder %s17, 3
      %p56 = scmp.ne.s32.totalorder %s51, %s53
      %p57 = scmp.eq.s32.totalorder %s17, 0
      %p58 = por %p56, %p57
      %p59 = scmp.ne.s32.totalorder %s51, %s53
      %p60 = scmp.eq.s32.totalorder %s22, 3
      %p61 = por %p59, %p60
      %p62 = scmp.ne.s32.totalorder %s53, %s54
      %p63 = scmp.eq.s32.totalorder %s22, 0
      %p64 = por %p62, %p63
      %p65 = scmp.ne.s32.totalorder %s53, %s54
      %p66 = scmp.eq.s32.totalorder %s23, 3
      %p67 = por %p65, %p66
      %p69 = scmp.ne.s32.totalorder %s54, %s68
      %p70 = scmp.eq.s32.totalorder %s23, 0
      %p71 = por %p69, %p70
      %s73 = sadd.s32 %s72, 1
      %p76 = scmp.eq.s32.totalorder %s17, 3
      %p77 = scmp.ne.s32.totalorder %s72, %s74
      %p78 = scmp.eq.s32.totalorder %s17, 0
      %p79 = por %p77, %p78
      %p80 = scmp.ne.s32.totalorder %s72, %s74
      %p81 = scmp.eq.s32.totalorder %s22, 3
      %p82 = por %p80, %p81
      %p83 = scmp.ne.s32.totalorder %s74, %s75
      %p84 = scmp.eq.s32.totalorder %s22, 0
      %p85 = por %p83, %p84
      %p86 = scmp.ne.s32.totalorder %s74, %s75
      %p87 = scmp.eq.s32.totalorder %s23, 3
      %p88 = por %p86, %p87
      %p90 = scmp.ne.s32.totalorder %s75, %s89
      %p91 = scmp.eq.s32.totalorder %s23, 0
      %p92 = por %p90, %p91
      %s94 = sadd.s32 %s93, 1
      %p97 = scmp.eq.s32.totalorder %s17, 3
      %p98 = scmp.ne.s32.totalorder %s93, %s95
      %p99 = scmp.eq.s32.totalorder %s17, 0
      %p100 = por %p98, %p99
      %p101 = scmp.ne.s32.totalorder %s93, %s95
      %p102 = scmp.eq.s32.totalorder %s22, 3
      %p103 = por %p101, %p102
      %p104 = scmp.ne.s32.totalorder %s95, %s96
      %p105 = scmp.eq.s32.totalorder %s22, 0
      %p106 = por %p104, %p105
      %p107 = scmp.ne.s32.totalorder %s95, %s96
      %p108 = scmp.eq.s32.totalorder %s23, 3
      %p109 = por %p107, %p108
      %p111 = scmp.ne.s32.totalorder %s96, %s110
      %p112 = scmp.eq.s32.totalorder %s23, 0
      %p113 = por %p111, %p112
      %s114 = ssub.s32 %s17, %s24
      %p115 = scmp.eq.s32.totalorder %s114, 0
      %s117 = sadd.s32 %s116, 1
      %s118 = scalar_select %p115, %s116, %s117
      %p121 = pneg %p115
      %p122 = scmp.eq.s32.totalorder %s17, 3
      %p123 = por %p121, %p122
      %p124 = scmp.ne.s32.totalorder %s116, %s119
      %p125 = scmp.eq.s32.totalorder %s17, 0
      %p126 = por %p124, %p125
      %p127 = scmp.ne.s32.totalorder %s116, %s119
      %p128 = scmp.eq.s32.totalorder %s22, 3
      %p129 = por %p127, %p128
      %p130 = scmp.ne.s32.totalorder %s119, %s120
      %p131 = scmp.eq.s32.totalorder %s22, 0
      %p132 = por %p130, %p131
      %p133 = scmp.ne.s32.totalorder %s119, %s120
      %p134 = scmp.eq.s32.totalorder %s23, 3
      %p135 = por %p133, %p134
      %p137 = scmp.ne.s32.totalorder %s120, %s136
      %p138 = scmp.eq.s32.totalorder %s23, 0
      %p139 = por %p137, %p138
      %p140 = scmp.le.s32.totalorder 1, %s17
      %p141 = scmp.lt.s32.totalorder %s17, 5
      %p142 = pnand %p140, %p141
      %p143 = pneg %p142
      // Predicated region
      $region9: #{tpu_custom_call.1} parent=5 // pred_check
        _
      $region10: #{tpu_custom_call.1} parent=5 // pred_check_branch
        %145 = sbr.rel (%p142) target = $region12
      $region11: #{tpu_custom_call.1} parent=5 // pred_region
        %s146 = ssub.s32 %s17, 1
        // Predicated region
        $region13: #{tpu_custom_call.1} parent=11 // pred_check
          %p147 = pneg %p64
        $region14: #{tpu_custom_call.1} parent=11 // pred_check_branch
          %149 = sbr.rel (%p147) target = $region16
        $region15: #{tpu_custom_call.1} parent=11 // pred_region
          _
        $region16: #{tpu_custom_call.1} parent=11 // pred_fallthru
          _
        // Predicated region
        $region17: #{tpu_custom_call.1} parent=11 // pred_check
          %p150 = pneg %p85
        $region18: #{tpu_custom_call.1} parent=11 // pred_check_branch
          %152 = sbr.rel (%p150) target = $region20
        $region19: #{tpu_custom_call.1} parent=11 // pred_region
          %s154 = ssub.s32 6144, 6144
          %155 = vsyncadd [#allocation6], %s154
          %s156 = sshll.u32 [#allocation5], 4
          %s157 = int_to_ptr.vmem [resolvable:$true] %s156
          %162 = dma.hbm_to_vmem [thread:$0]  %s2, 6144, %s157, [#allocation6], 192, 192, 12
        $region20: #{tpu_custom_call.1} parent=11 // pred_fallthru
          _
        // Predicated region
        $region21: #{tpu_custom_call.1} parent=11 // pred_check
          %p163 = pneg %p106
        $region22: #{tpu_custom_call.1} parent=11 // pred_check_branch
          %165 = sbr.rel (%p163) target = $region24
        $region23: #{tpu_custom_call.1} parent=11 // pred_region
          _
        $region24: #{tpu_custom_call.1} parent=11 // pred_fallthru
          _
      $region12: #{tpu_custom_call.1} parent=5 // pred_fallthru
        _
      %p166 = scmp.lt.s32.totalorder %s17, 4
      // Predicated region
      $region25: #{tpu_custom_call.1} parent=5 // pred_check
        %p167 = pneg %p166
      $region26: #{tpu_custom_call.1} parent=5 // pred_check_branch
        %169 = sbr.rel (%p167) target = $region28
      $region27: #{tpu_custom_call.1} parent=5 // pred_region
        // Predicated region
        $region29: #{tpu_custom_call.1} parent=27 // pred_check
          %p170 = pneg %p37
        $region30: #{tpu_custom_call.1} parent=27 // pred_check_branch
          %172 = sbr.rel (%p170) target = $region32
        $region31: #{tpu_custom_call.1} parent=27 // pred_region
          %s173 = sand.u32 %s27, 1
          %s174 = scalar_lea.sflag [#allocation3], %s173
          %s175 = sand.u32 %s27, 1
          %s176 = smul.addr %s175, 32
          %s177 = scalar_lea.vmem [#allocation2], %s176
          %s178 = smul.u32 8, %s17
          %s180 = ssub.s32 512, 512
          %181 = vsyncadd %s174, %s180
          %s182 = smul.addr %s178, 64
          %s183 = scalar_lea.hbm %s0, %s182
          %s184 = sshll.u32 %s177, 4
          %s185 = int_to_ptr.vmem [resolvable:$true] %s184
          %190 = dma.hbm_to_vmem [thread:$0]  %s183, 512, %s185, %s174, 64, 64, 4
        $region32: #{tpu_custom_call.1} parent=27 // pred_fallthru
          _
      $region28: #{tpu_custom_call.1} parent=5 // pred_fallthru
        _
      %p191 = scmp.le.s32.totalorder 1, %s17
      %p192 = scmp.lt.s32.totalorder %s17, 5
      %p193 = pnand %p191, %p192
      %p194 = pneg %p193
      // Predicated region
      $region33: #{tpu_custom_call.1} parent=5 // pred_check
        _
      $region34: #{tpu_custom_call.1} parent=5 // pred_check_branch
        %196 = sbr.rel (%p193) target = $region36
      $region35: #{tpu_custom_call.1} parent=5 // pred_region
        %s197 = ssub.s32 %s17, 1
        %s198 = sand.u32 %s30, 1
        %s199 = scalar_lea.sflag [#allocation3], %s198
        %s200 = sand.u32 %s30, 1
        %s201 = smul.addr %s200, 32
        %s202 = scalar_lea.vmem [#allocation2], %s201
        // Predicated region
        $region37: #{tpu_custom_call.1} parent=35 // pred_check
          %p203 = pneg %p43
        $region38: #{tpu_custom_call.1} parent=35 // pred_check_branch
          %205 = sbr.rel (%p203) target = $region40
        $region39: #{tpu_custom_call.1} parent=35 // pred_region
          %206 = dma.done %s199, 512
        $region40: #{tpu_custom_call.1} parent=35 // pred_fallthru
          _
        // Predicated region
        $region41: #{tpu_custom_call.1} parent=35 // pred_check
          %p207 = pneg %p85
        $region42: #{tpu_custom_call.1} parent=35 // pred_check_branch
          %209 = sbr.rel (%p207) target = $region44
        $region43: #{tpu_custom_call.1} parent=35 // pred_region
          %210 = dma.done [#allocation6], 6144
        $region44: #{tpu_custom_call.1} parent=35 // pred_fallthru
          _
        %s211 = sand.u32 %s30, 1
        %s212 = scalar_lea.sflag [#allocation3], %s211
        %s213 = sand.u32 %s30, 1
        %s214 = smul.addr %s213, 32
        %s215 = scalar_lea.vmem [#allocation2], %s214
        %p216 = pneg %p43
        %p217 = pneg %p40
        %p218 = pneg %p64
        %p219 = pneg %p61
        %p220 = pneg %p85
        %p221 = pneg %p82
        %p222 = pneg %p106
        %p223 = pneg %p103
        %p224 = pneg %p132
        %p225 = pneg %p129
        %s226 = sand.u32 %s119, 1
        %s227 = scalar_lea.sflag [#allocation4], %s226
        %s228 = sand.u32 %s119, 1
        %s229 = smul.addr %s228, 32
        %s230 = scalar_lea.vmem [#allocation7], %s229
        %s231 = smul.u32 8, %s22
        %s232 = smul.u32 8, %s22
        %v234 = vld [vmem:[%s202] sm:$0xf]
        %v235 = vld [vmem:[%s202 + $0x4] sm:$0xf]
        %v236 = vld [vmem:[%s202 + $0x8] sm:$0xf]
        %v237 = vld [vmem:[%s202 + $0xc] sm:$0xf]
        %v238 = vld [vmem:[%s202 + $0x10] sm:$0xf]
        %v239 = vld [vmem:[%s202 + $0x14] sm:$0xf]
        %v240 = vld [vmem:[%s202 + $0x18] sm:$0xf]
        %v241 = vld [vmem:[%s202 + $0x1c] sm:$0xf]
        %v242 = vunpack.c.l.bf16 %v234
        %v243 = vunpack.c.l.bf16 %v235
        %v244 = vunpack.c.l.bf16 %v236
        %v245 = vunpack.c.l.bf16 %v237
        %v246 = vunpack.c.l.bf16 %v238
        %v247 = vunpack.c.l.bf16 %v239
        %v248 = vunpack.c.l.bf16 %v240
        %v249 = vunpack.c.l.bf16 %v241
        %v250 = vrot.slane %v242, 7
        %v251 = vrot.slane %v243, 7
        %v252 = vrot.slane %v244, 7
        %v253 = vrot.slane %v245, 7
        %v254 = vrot.slane %v246, 7
        %v255 = vrot.slane %v247, 7
        %v256 = vrot.slane %v248, 7
        %v257 = vrot.slane %v249, 7
        %v258 = vlaneseq
        %v259 = vshrl.u32 %v258, 7
        %vm260 = vcmp.lt.s32.totalorder %v259, 1
        %v261 = vsel %vm260, %v256, %v257
        %v262 = vsel %vm260, %v255, %v256
        %v263 = vsel %vm260, %v254, %v255
        %v264 = vsel %vm260, %v253, %v254
        %v265 = vsel %vm260, %v252, %v253
        %v266 = vsel %vm260, %v251, %v252
        %v267 = vsel %vm260, %v250, %v251
        %v268 = vsel %vm260, %v257, %v250
        %v269 = vld [vmem:[%s1] sm:$0xff]
        %v270 = vld [vmem:[%s1 + $0x8] sm:$0xff]
        %v271 = vld [vmem:[%s1 + $0x10] sm:$0xff]
        %v272 = vld [vmem:[%s1 + $0x18] sm:$0xff]
        %v273 = vld [vmem:[%s1 + $0x20] sm:$0xff]
        %v274 = vld [vmem:[%s1 + $0x28] sm:$0xff]
        %v275 = vld [vmem:[%s1 + $0x30] sm:$0xff]
        %v276 = vld [vmem:[%s1 + $0x38] sm:$0xff]
        %278 = vset.pattern.permute.xlu0 0
        %279 = vperm.xlu0 %278, %v269
        %v280 = vpop.permute.xlu0 %279
        %283 = vset.pattern.permute.xlu0 0
        %284 = vperm.xlu0 %283, %v270
        %v285 = vpop.permute.xlu0 %284
        %288 = vset.pattern.permute.xlu0 0
        %289 = vperm.xlu0 %288, %v271
        %v290 = vpop.permute.xlu0 %289
        %293 = vset.pattern.permute.xlu0 0
        %294 = vperm.xlu0 %293, %v272
        %v295 = vpop.permute.xlu0 %294
        %298 = vset.pattern.permute.xlu0 0
        %299 = vperm.xlu0 %298, %v273
        %v300 = vpop.permute.xlu0 %299
        %303 = vset.pattern.permute.xlu0 0
        %304 = vperm.xlu0 %303, %v274
        %v305 = vpop.permute.xlu0 %304
        %308 = vset.pattern.permute.xlu0 0
        %309 = vperm.xlu0 %308, %v275
        %v310 = vpop.permute.xlu0 %309
        %313 = vset.pattern.permute.xlu0 0
        %314 = vperm.xlu0 %313, %v276
        %v315 = vpop.permute.xlu0 %314
        %v317 = vmul.f32 %v268, %v280
        %v318 = vmul.f32 %v267, %v285
        %v319 = vmul.f32 %v266, %v290
        %v320 = vmul.f32 %v265, %v295
        %v321 = vmul.f32 %v264, %v300
        %v322 = vmul.f32 %v263, %v305
        %v323 = vmul.f32 %v262, %v310
        %v324 = vmul.f32 %v261, %v315
        %v325 = vpack.c.bf16 %v243, %v242
        %v326 = vpack.c.bf16 %v318, %v317
        %v327 = vpack.c.bf16 %v245, %v244
        %v328 = vpack.c.bf16 %v320, %v319
        %v329 = vpack.c.bf16 %v247, %v246
        %v330 = vpack.c.bf16 %v322, %v321
        %v331 = vpack.c.bf16 %v249, %v248
        %v332 = vpack.c.bf16 %v324, %v323
        %v333 = vld [vmem:[#allocation5] sm:$0xff]
        %v334 = vld [vmem:[#allocation5 + $0x8] sm:$0xf]
        %v335 = vld [vmem:[#allocation5 + $0xc] sm:$0xff]
        %v336 = vld [vmem:[#allocation5 + $0x14] sm:$0xf]
        %v337 = vld [vmem:[#allocation5 + $0x18] sm:$0xff]
        %v338 = vld [vmem:[#allocation5 + $0x20] sm:$0xf]
        %v339 = vld [vmem:[#allocation5 + $0x24] sm:$0xff]
        %v340 = vld [vmem:[#allocation5 + $0x2c] sm:$0xf]
        %v341 = vld [vmem:[#allocation5 + $0x30] sm:$0xff]
        %v342 = vld [vmem:[#allocation5 + $0x38] sm:$0xf]
        %v343 = vld [vmem:[#allocation5 + $0x3c] sm:$0xff]
        %v344 = vld [vmem:[#allocation5 + $0x44] sm:$0xf]
        %v345 = vld [vmem:[#allocation5 + $0x48] sm:$0xff]
        %v346 = vld [vmem:[#allocation5 + $0x50] sm:$0xf]
        %v347 = vld [vmem:[#allocation5 + $0x54] sm:$0xff]
        %v348 = vld [vmem:[#allocation5 + $0x5c] sm:$0xf]
        %v349 = vld [vmem:[#allocation5 + $0x60] sm:$0xff]
        %v350 = vld [vmem:[#allocation5 + $0x68] sm:$0xf]
        %v351 = vld [vmem:[#allocation5 + $0x6c] sm:$0xff]
        %v352 = vld [vmem:[#allocation5 + $0x74] sm:$0xf]
        %v353 = vld [vmem:[#allocation5 + $0x78] sm:$0xff]
        %v354 = vld [vmem:[#allocation5 + $0x80] sm:$0xf]
        %v355 = vld [vmem:[#allocation5 + $0x84] sm:$0xff]
        %v356 = vld [vmem:[#allocation5 + $0x8c] sm:$0xf]
        %v357 = vld [vmem:[#allocation5 + $0x90] sm:$0xff]
        %v358 = vld [vmem:[#allocation5 + $0x98] sm:$0xf]
        %v359 = vld [vmem:[#allocation5 + $0x9c] sm:$0xff]
        %v360 = vld [vmem:[#allocation5 + $0xa4] sm:$0xf]
        %v361 = vld [vmem:[#allocation5 + $0xa8] sm:$0xff]
        %v362 = vld [vmem:[#allocation5 + $0xb0] sm:$0xf]
        %v363 = vld [vmem:[#allocation5 + $0xb4] sm:$0xff]
        %v364 = vld [vmem:[#allocation5 + $0xbc] sm:$0xf]
        %v365 = vld [vmem:[#allocation5 + $0xc0] sm:$0xff]
        %v366 = vld [vmem:[#allocation5 + $0xc8] sm:$0xf]
        %v367 = vld [vmem:[#allocation5 + $0xcc] sm:$0xff]
        %v368 = vld [vmem:[#allocation5 + $0xd4] sm:$0xf]
        %v369 = vld [vmem:[#allocation5 + $0xd8] sm:$0xff]
        %v370 = vld [vmem:[#allocation5 + $0xe0] sm:$0xf]
        %v371 = vld [vmem:[#allocation5 + $0xe4] sm:$0xff]
        %v372 = vld [vmem:[#allocation5 + $0xec] sm:$0xf]
        %v373 = vld [vmem:[#allocation5 + $0xf0] sm:$0xff]
        %v374 = vld [vmem:[#allocation5 + $0xf8] sm:$0xf]
        %v375 = vld [vmem:[#allocation5 + $0xfc] sm:$0xff]
        %v376 = vld [vmem:[#allocation5 + $0x104] sm:$0xf]
        %v377 = vld [vmem:[#allocation5 + $0x108] sm:$0xff]
        %v378 = vld [vmem:[#allocation5 + $0x110] sm:$0xf]
        %v379 = vld [vmem:[#allocation5 + $0x114] sm:$0xff]
        %v380 = vld [vmem:[#allocation5 + $0x11c] sm:$0xf]
        %v381 = vld [vmem:[#allocation5 + $0x120] sm:$0xff]
        %v382 = vld [vmem:[#allocation5 + $0x128] sm:$0xf]
        %v383 = vld [vmem:[#allocation5 + $0x12c] sm:$0xff]
        %v384 = vld [vmem:[#allocation5 + $0x134] sm:$0xf]
        %v385 = vld [vmem:[#allocation5 + $0x138] sm:$0xff]
        %v386 = vld [vmem:[#allocation5 + $0x140] sm:$0xf]
        %v387 = vld [vmem:[#allocation5 + $0x144] sm:$0xff]
        %v388 = vld [vmem:[#allocation5 + $0x14c] sm:$0xf]
        %v389 = vld [vmem:[#allocation5 + $0x150] sm:$0xff]
        %v390 = vld [vmem:[#allocation5 + $0x158] sm:$0xf]
        %v391 = vld [vmem:[#allocation5 + $0x15c] sm:$0xff]
        %v392 = vld [vmem:[#allocation5 + $0x164] sm:$0xf]
        %v393 = vld [vmem:[#allocation5 + $0x168] sm:$0xff]
        %v394 = vld [vmem:[#allocation5 + $0x170] sm:$0xf]
        %v395 = vld [vmem:[#allocation5 + $0x174] sm:$0xff]
        %v396 = vld [vmem:[#allocation5 + $0x17c] sm:$0xf]
        %v461 = vunpack.c.l.b16 %v333
        %v462 = vunpack.c.h.b16 %v333
        %v463 = vunpack.c.l.b16 %v334
        %v464 = vunpack.c.l.b16 %v335
        %v465 = vunpack.c.h.b16 %v335
        %v466 = vunpack.c.l.b16 %v336
        %v467 = vunpack.c.l.b16 %v337
        %v468 = vunpack.c.h.b16 %v337
        %v469 = vunpack.c.l.b16 %v338
        %v470 = vunpack.c.l.b16 %v339
        %v471 = vunpack.c.h.b16 %v339
        %v472 = vunpack.c.l.b16 %v340
        %v473 = vunpack.c.l.b16 %v341
        %v474 = vunpack.c.h.b16 %v341
        %v475 = vunpack.c.l.b16 %v342
        %v476 = vunpack.c.l.b16 %v343
        %v477 = vunpack.c.h.b16 %v343
        %v478 = vunpack.c.l.b16 %v344
        %v479 = vunpack.c.l.b16 %v345
        %v480 = vunpack.c.h.b16 %v345
        %v481 = vunpack.c.l.b16 %v346
        %v482 = vunpack.c.l.b16 %v347
        %v483 = vunpack.c.h.b16 %v347
        %v484 = vunpack.c.l.b16 %v348
        %v485 = vunpack.c.l.b16 %v349
        %v486 = vunpack.c.h.b16 %v349
        %v487 = vunpack.c.l.b16 %v350
        %v488 = vunpack.c.l.b16 %v351
        %v489 = vunpack.c.h.b16 %v351
        %v490 = vunpack.c.l.b16 %v352
        %v491 = vunpack.c.l.b16 %v353
        %v492 = vunpack.c.h.b16 %v353
        %v493 = vunpack.c.l.b16 %v354
        %v494 = vunpack.c.l.b16 %v355
        %v495 = vunpack.c.h.b16 %v355
        %v496 = vunpack.c.l.b16 %v356
        %v497 = vunpack.c.l.b16 %v357
        %v498 = vunpack.c.h.b16 %v357
        %v499 = vunpack.c.l.b16 %v358
        %v500 = vunpack.c.l.b16 %v359
        %v501 = vunpack.c.h.b16 %v359
        %v502 = vunpack.c.l.b16 %v360
        %v503 = vunpack.c.l.b16 %v361
        %v504 = vunpack.c.h.b16 %v361
        %v505 = vunpack.c.l.b16 %v362
        %v506 = vunpack.c.l.b16 %v363
        %v507 = vunpack.c.h.b16 %v363
        %v508 = vunpack.c.l.b16 %v364
        %v509 = vunpack.c.l.b16 %v365
        %v510 = vunpack.c.h.b16 %v365
        %v511 = vunpack.c.l.b16 %v366
        %v512 = vunpack.c.l.b16 %v367
        %v513 = vunpack.c.h.b16 %v367
        %v514 = vunpack.c.l.b16 %v368
        %v515 = vunpack.c.l.b16 %v369
        %v516 = vunpack.c.h.b16 %v369
        %v517 = vunpack.c.l.b16 %v370
        %v518 = vunpack.c.l.b16 %v371
        %v519 = vunpack.c.h.b16 %v371
        %v520 = vunpack.c.l.b16 %v372
        %v521 = vunpack.c.l.b16 %v373
        %v522 = vunpack.c.h.b16 %v373
        %v523 = vunpack.c.l.b16 %v374
        %v524 = vunpack.c.l.b16 %v375
        %v525 = vunpack.c.h.b16 %v375
        %v526 = vunpack.c.l.b16 %v376
        %v527 = vunpack.c.l.b16 %v377
        %v528 = vunpack.c.h.b16 %v377
        %v529 = vunpack.c.l.b16 %v378
        %v530 = vunpack.c.l.b16 %v379
        %v531 = vunpack.c.h.b16 %v379
        %v532 = vunpack.c.l.b16 %v380
        %v533 = vunpack.c.l.b16 %v381
        %v534 = vunpack.c.h.b16 %v381
        %v535 = vunpack.c.l.b16 %v382
        %v536 = vunpack.c.l.b16 %v383
        %v537 = vunpack.c.h.b16 %v383
        %v538 = vunpack.c.l.b16 %v384
        %v539 = vunpack.c.l.b16 %v385
        %v540 = vunpack.c.h.b16 %v385
        %v541 = vunpack.c.l.b16 %v386
        %v542 = vunpack.c.l.b16 %v387
        %v543 = vunpack.c.h.b16 %v387
        %v544 = vunpack.c.l.b16 %v388
        %v545 = vunpack.c.l.b16 %v389
        %v546 = vunpack.c.h.b16 %v389
        %v547 = vunpack.c.l.b16 %v390
        %v548 = vunpack.c.l.b16 %v391
        %v549 = vunpack.c.h.b16 %v391
        %v550 = vunpack.c.l.b16 %v392
        %v551 = vunpack.c.l.b16 %v393
        %v552 = vunpack.c.h.b16 %v393
        %v553 = vunpack.c.l.b16 %v394
        %v554 = vunpack.c.l.b16 %v395
        %v555 = vunpack.c.h.b16 %v395
        %v556 = vunpack.c.l.b16 %v396
        %v557 = vpack.c.b16 %v464, %v461
        %v558 = vpack.c.b16 %v465, %v462
        %v559 = vpack.c.b16 %v466, %v463
        %v560 = vpack.c.b16 %v470, %v467
        %v561 = vpack.c.b16 %v471, %v468
        %v562 = vpack.c.b16 %v472, %v469
        %v563 = vpack.c.b16 %v476, %v473
        %v564 = vpack.c.b16 %v477, %v474
        %v565 = vpack.c.b16 %v478, %v475
        %v566 = vpack.c.b16 %v482, %v479
        %v567 = vpack.c.b16 %v483, %v480
        %v568 = vpack.c.b16 %v484, %v481
        %v569 = vpack.c.b16 %v488, %v485
        %v570 = vpack.c.b16 %v489, %v486
        %v571 = vpack.c.b16 %v490, %v487
        %v572 = vpack.c.b16 %v494, %v491
        %v573 = vpack.c.b16 %v495, %v492
        %v574 = vpack.c.b16 %v496, %v493
        %v575 = vpack.c.b16 %v500, %v497
        %v576 = vpack.c.b16 %v501, %v498
        %v577 = vpack.c.b16 %v502, %v499
        %v578 = vpack.c.b16 %v506, %v503
        %v579 = vpack.c.b16 %v507, %v504
        %v580 = vpack.c.b16 %v508, %v505
        %v581 = vpack.c.b16 %v512, %v509
        %v582 = vpack.c.b16 %v513, %v510
        %v583 = vpack.c.b16 %v514, %v511
        %v584 = vpack.c.b16 %v518, %v515
        %v585 = vpack.c.b16 %v519, %v516
        %v586 = vpack.c.b16 %v520, %v517
        %v587 = vpack.c.b16 %v524, %v521
        %v588 = vpack.c.b16 %v525, %v522
        %v589 = vpack.c.b16 %v526, %v523
        %v590 = vpack.c.b16 %v530, %v527
        %v591 = vpack.c.b16 %v531, %v528
        %v592 = vpack.c.b16 %v532, %v529
        %v593 = vpack.c.b16 %v536, %v533
        %v594 = vpack.c.b16 %v537, %v534
        %v595 = vpack.c.b16 %v538, %v535
        %v596 = vpack.c.b16 %v542, %v539
        %v597 = vpack.c.b16 %v543, %v540
        %v598 = vpack.c.b16 %v544, %v541
        %v599 = vpack.c.b16 %v548, %v545
        %v600 = vpack.c.b16 %v549, %v546
        %v601 = vpack.c.b16 %v550, %v547
        %v602 = vpack.c.b16 %v554, %v551
        %v603 = vpack.c.b16 %v555, %v552
        %v604 = vpack.c.b16 %v556, %v553
        %653 = vmatprep.subr.bf16.mxu0 %v558
        %654 = vmatpush1.bf16.msra.mxu0 %v557
        %655 = vmatprep.subr.bf16.mxu0 %v561
        %656 = vmatpush1.bf16.msra.mxu0 %v560
        %657 = vmatprep.subr.bf16.mxu0 %v564
        %658 = vmatpush1.bf16.msra.mxu0 %v563
        %659 = vmatprep.subr.bf16.mxu0 %v567
        %660 = vmatpush1.bf16.msra.mxu0 %v566
        %661 = vmatprep.subr.bf16.mxu0 %v570
        %662 = vmatpush1.bf16.msra.mxu0 %v569
        %663 = vmatprep.subr.bf16.mxu0 %v573
        %664 = vmatpush1.bf16.msra.mxu0 %v572
        %665 = vmatprep.subr.bf16.mxu0 %v576
        %666 = vmatpush1.bf16.msra.mxu0 %v575
        %667 = vmatprep.subr.bf16.mxu0 %v579
        %668 = vmatpush1.bf16.msra.mxu0 %v578
        %669 = vmatprep.subr.bf16.mxu0 %v582
        %670 = vmatpush1.bf16.msra.mxu0 %v581
        %671 = vmatprep.subr.bf16.mxu0 %v585
        %672 = vmatpush1.bf16.msra.mxu0 %v584
        %673 = vmatprep.subr.bf16.mxu0 %v588
        %674 = vmatpush1.bf16.msra.mxu0 %v587
        %675 = vmatprep.subr.bf16.mxu0 %v591
        %676 = vmatpush1.bf16.msra.mxu0 %v590
        %677 = vmatprep.subr.bf16.mxu0 %v594
        %678 = vmatpush1.bf16.msra.mxu0 %v593
        %679 = vmatprep.subr.bf16.mxu0 %v597
        %680 = vmatpush1.bf16.msra.mxu0 %v596
        %681 = vmatprep.subr.bf16.mxu0 %v600
        %682 = vmatpush1.bf16.msra.mxu0 %v599
        %683 = vmatprep.subr.bf16.mxu0 %v603
        %684 = vmatpush1.bf16.msra.mxu0 %v602
        %685 = vmatprep.mubr.bf16.mxu0 %v326
        %686 = vmatmul.mubr.bf16.gmra.mrb[0].mxu0 %v325
        %v687 = vpop.f32.mrb[0].mxu0
        %v688 = vadd.f32 0.0, %v687
        %v689 = vpop.f32.mrb[0].mxu0
        %v690 = vadd.f32 0.0, %v689
        %v691 = vpop.f32.mrb[0].mxu0
        %v692 = vadd.f32 0.0, %v691
        %v693 = vpop.f32.mrb[0].mxu0
        %v694 = vadd.f32 0.0, %v693
        %695 = vmatprep.mubr.bf16.mxu0 %v328
        %696 = vmatmul.mubr.bf16.gmra.mrb[0].mxu0 %v327
        %v697 = vpop.f32.mrb[0].mxu0
        %v698 = vadd.f32 0.0, %v697
        %v699 = vpop.f32.mrb[0].mxu0
        %v700 = vadd.f32 0.0, %v699
        %v701 = vpop.f32.mrb[0].mxu0
        %v702 = vadd.f32 0.0, %v701
        %v703 = vpop.f32.mrb[0].mxu0
        %v704 = vadd.f32 0.0, %v703
        %705 = vmatprep.mubr.bf16.mxu0 %v330
        %706 = vmatmul.mubr.bf16.gmra.mrb[0].mxu0 %v329
        %v707 = vpop.f32.mrb[0].mxu0
        %v708 = vadd.f32 0.0, %v707
        %v709 = vpop.f32.mrb[0].mxu0
        %v710 = vadd.f32 0.0, %v709
        %v711 = vpop.f32.mrb[0].mxu0
        %v712 = vadd.f32 0.0, %v711
        %v713 = vpop.f32.mrb[0].mxu0
        %v714 = vadd.f32 0.0, %v713
        %715 = vmatprep.mubr.bf16.mxu0 %v332
        %716 = vmatmul.mubr.bf16.gmra.mrb[0].mxu0 %v331
        %v717 = vpop.f32.mrb[0].mxu0
        %v718 = vadd.f32 0.0, %v717
        %v719 = vpop.f32.mrb[0].mxu0
        %v720 = vadd.f32 0.0, %v719
        %v721 = vpop.f32.mrb[0].mxu0
        %v722 = vadd.f32 0.0, %v721
        %v723 = vpop.f32.mrb[0].mxu0
        %v724 = vadd.f32 0.0, %v723
        %725 = vdwg.mxu0
        %726 = vmatprep.subr.bf16.mxu0 0
        %727 = vmatpush1.bf16.msra.mxu0 %v559
        %728 = vmatprep.subr.bf16.mxu0 0
        %729 = vmatpush1.bf16.msra.mxu0 %v562
        %730 = vmatprep.subr.bf16.mxu0 0
        %731 = vmatpush1.bf16.msra.mxu0 %v565
        %732 = vmatprep.subr.bf16.mxu0 0
        %733 = vmatpush1.bf16.msra.mxu0 %v568
        %734 = vmatprep.subr.bf16.mxu0 0
        %735 = vmatpush1.bf16.msra.mxu0 %v571
        %736 = vmatprep.subr.bf16.mxu0 0
        %737 = vmatpush1.bf16.msra.mxu0 %v574
        %738 = vmatprep.subr.bf16.mxu0 0
        %739 = vmatpush1.bf16.msra.mxu0 %v577
        %740 = vmatprep.subr.bf16.mxu0 0
        %741 = vmatpush1.bf16.msra.mxu0 %v580
        %742 = vmatprep.subr.bf16.mxu0 0
        %743 = vmatpush1.bf16.msra.mxu0 %v583
        %744 = vmatprep.subr.bf16.mxu0 0
        %745 = vmatpush1.bf16.msra.mxu0 %v586
        %746 = vmatprep.subr.bf16.mxu0 0
        %747 = vmatpush1.bf16.msra.mxu0 %v589
        %748 = vmatprep.subr.bf16.mxu0 0
        %749 = vmatpush1.bf16.msra.mxu0 %v592
        %750 = vmatprep.subr.bf16.mxu0 0
        %751 = vmatpush1.bf16.msra.mxu0 %v595
        %752 = vmatprep.subr.bf16.mxu0 0
        %753 = vmatpush1.bf16.msra.mxu0 %v598
        %754 = vmatprep.subr.bf16.mxu0 0
        %755 = vmatpush1.bf16.msra.mxu0 %v601
        %756 = vmatprep.subr.bf16.mxu0 0
        %757 = vmatpush1.bf16.msra.mxu0 %v604
        %758 = vmatprep.mubr.bf16.mxu0 %v326
        %759 = vmatmul.mubr.bf16.gmra.mrb[0].mxu0 %v325
        %v760 = vpop.f32.mrb[0].mxu0
        %v761 = vadd.f32 0.0, %v760
        %v762 = vpop.f32.mrb[0].mxu0
        %v763 = vpop.f32.mrb[0].mxu0
        %v764 = vadd.f32 0.0, %v763
        %v765 = vpop.f32.mrb[0].mxu0
        %766 = vmatprep.mubr.bf16.mxu0 %v328
        %767 = vmatmul.mubr.bf16.gmra.mrb[0].mxu0 %v327
        %v768 = vpop.f32.mrb[0].mxu0
        %v769 = vadd.f32 0.0, %v768
        %v770 = vpop.f32.mrb[0].mxu0
        %v771 = vpop.f32.mrb[0].mxu0
        %v772 = vadd.f32 0.0, %v771
        %v773 = vpop.f32.mrb[0].mxu0
        %774 = vmatprep.mubr.bf16.mxu0 %v330
        %775 = vmatmul.mubr.bf16.gmra.mrb[0].mxu0 %v329
        %v776 = vpop.f32.mrb[0].mxu0
        %v777 = vadd.f32 0.0, %v776
        %v778 = vpop.f32.mrb[0].mxu0
        %v779 = vpop.f32.mrb[0].mxu0
        %v780 = vadd.f32 0.0, %v779
        %v781 = vpop.f32.mrb[0].mxu0
        %782 = vmatprep.mubr.bf16.mxu0 %v332
        %783 = vmatmul.mubr.bf16.gmra.mrb[0].mxu0 %v331
        %v784 = vpop.f32.mrb[0].mxu0
        %v785 = vadd.f32 0.0, %v784
        %v786 = vpop.f32.mrb[0].mxu0
        %v787 = vpop.f32.mrb[0].mxu0
        %v788 = vadd.f32 0.0, %v787
        %v789 = vpop.f32.mrb[0].mxu0
        %790 = vdwg.mxu0
        %v791 = vxor.u32 %v761, 2147483648
        %v792 = vxor.u32 %v764, 2147483648
        %v793 = vxor.u32 %v769, 2147483648
        %v794 = vxor.u32 %v772, 2147483648
        %v795 = vxor.u32 %v777, 2147483648
        %v796 = vxor.u32 %v780, 2147483648
        %v797 = vxor.u32 %v785, 2147483648
        %v798 = vxor.u32 %v788, 2147483648
        %v799 = vmul.f32 %v791, 1.442695
        %v800 = vpow.pop %v799
        %v801 = vmul.f32 %v792, 1.442695
        %v802 = vpow.pop %v801
        %v803 = vmul.f32 %v793, 1.442695
        %v804 = vpow.pop %v803
        %v805 = vmul.f32 %v794, 1.442695
        %v806 = vpow.pop %v805
        %v807 = vmul.f32 %v795, 1.442695
        %v808 = vpow.pop %v807
        %v809 = vmul.f32 %v796, 1.442695
        %v810 = vpow.pop %v809
        %v811 = vmul.f32 %v797, 1.442695
        %v812 = vpow.pop %v811
        %v813 = vmul.f32 %v798, 1.442695
        %v814 = vpow.pop %v813
        %v815 = vadd.f32 %v800, 1.0
        %v816 = vadd.f32 %v802, 1.0
        %v817 = vadd.f32 %v804, 1.0
        %v818 = vadd.f32 %v806, 1.0
        %v819 = vadd.f32 %v808, 1.0
        %v820 = vadd.f32 %v810, 1.0
        %v821 = vadd.f32 %v812, 1.0
        %v822 = vadd.f32 %v814, 1.0
        %v823 = vrcp.pop %v815
        %v824 = vmul.f32 1.0, %v823
        %v825 = vrcp.pop %v816
        %v826 = vmul.f32 1.0, %v825
        %v827 = vrcp.pop %v817
        %v828 = vmul.f32 1.0, %v827
        %v829 = vrcp.pop %v818
        %v830 = vmul.f32 1.0, %v829
        %v831 = vrcp.pop %v819
        %v832 = vmul.f32 1.0, %v831
        %v833 = vrcp.pop %v820
        %v834 = vmul.f32 1.0, %v833
        %v835 = vrcp.pop %v821
        %v836 = vmul.f32 1.0, %v835
        %v837 = vrcp.pop %v822
        %v838 = vmul.f32 1.0, %v837
        %v839 = vmul.f32 %v688, %v690
        %v840 = vmul.f32 %v692, %v694
        %v841 = vmul.f32 %v698, %v700
        %v842 = vmul.f32 %v702, %v704
        %v843 = vmul.f32 %v708, %v710
        %v844 = vmul.f32 %v712, %v714
        %v845 = vmul.f32 %v718, %v720
        %v846 = vmul.f32 %v722, %v724
        %v847 = vadd.f32 %v688, 1e-08
        %v848 = vadd.f32 %v692, 1e-08
        %v849 = vadd.f32 %v698, 1e-08
        %v850 = vadd.f32 %v702, 1e-08
        %v851 = vadd.f32 %v708, 1e-08
        %v852 = vadd.f32 %v712, 1e-08
        %v853 = vadd.f32 %v718, 1e-08
        %v854 = vadd.f32 %v722, 1e-08
        %v855 = vrcp.pop %v847
        %v856 = vmul.f32 %v839, %v855
        %v857 = vrcp.pop %v848
        %v858 = vmul.f32 %v840, %v857
        %v859 = vrcp.pop %v849
        %v860 = vmul.f32 %v841, %v859
        %v861 = vrcp.pop %v850
        %v862 = vmul.f32 %v842, %v861
        %v863 = vrcp.pop %v851
        %v864 = vmul.f32 %v843, %v863
        %v865 = vrcp.pop %v852
        %v866 = vmul.f32 %v844, %v865
        %v867 = vrcp.pop %v853
        %v868 = vmul.f32 %v845, %v867
        %v869 = vrcp.pop %v854
        %v870 = vmul.f32 %v846, %v869
        %v871 = vmul.f32 %v824, %v856
        %v872 = vmul.f32 %v826, %v858
        %v873 = vmul.f32 %v828, %v860
        %v874 = vmul.f32 %v830, %v862
        %v875 = vmul.f32 %v832, %v864
        %v876 = vmul.f32 %v834, %v866
        %v877 = vmul.f32 %v836, %v868
        %v878 = vmul.f32 %v838, %v870
        %v879 = vpack.c.bf16 %v872, %v871
        %v880 = vpack.c.bf16 %v874, %v873
        %v881 = vpack.c.bf16 %v876, %v875
        %v882 = vpack.c.bf16 %v878, %v877
        %v883 = vld [vmem:[%s3] sm:$0xf]
        %v884 = vld [vmem:[%s3 + $0x4] sm:$0xf]
        %v885 = vld [vmem:[%s3 + $0x8] sm:$0xf]
        %v886 = vld [vmem:[%s3 + $0xc] sm:$0xf]
        %v887 = vld [vmem:[%s3 + $0x10] sm:$0xf]
        %v888 = vld [vmem:[%s3 + $0x14] sm:$0xf]
        %v889 = vld [vmem:[%s3 + $0x18] sm:$0xf]
        %v890 = vld [vmem:[%s3 + $0x1c] sm:$0xf]
        %v891 = vld [vmem:[%s3 + $0x20] sm:$0xf]
        %v892 = vld [vmem:[%s3 + $0x24] sm:$0xf]
        %v893 = vld [vmem:[%s3 + $0x28] sm:$0xf]
        %v894 = vld [vmem:[%s3 + $0x2c] sm:$0xf]
        %v895 = vld [vmem:[%s3 + $0x30] sm:$0xf]
        %v896 = vld [vmem:[%s3 + $0x34] sm:$0xf]
        %v897 = vld [vmem:[%s3 + $0x38] sm:$0xf]
        %v898 = vld [vmem:[%s3 + $0x3c] sm:$0xf]
        %v915 = vunpack.c.l.b16 %v883
        %v916 = vunpack.c.l.b16 %v884
        %v917 = vunpack.c.l.b16 %v885
        %v918 = vunpack.c.l.b16 %v886
        %v919 = vunpack.c.l.b16 %v887
        %v920 = vunpack.c.l.b16 %v888
        %v921 = vunpack.c.l.b16 %v889
        %v922 = vunpack.c.l.b16 %v890
        %v923 = vunpack.c.l.b16 %v891
        %v924 = vunpack.c.l.b16 %v892
        %v925 = vunpack.c.l.b16 %v893
        %v926 = vunpack.c.l.b16 %v894
        %v927 = vunpack.c.l.b16 %v895
        %v928 = vunpack.c.l.b16 %v896
        %v929 = vunpack.c.l.b16 %v897
        %v930 = vunpack.c.l.b16 %v898
        %v931 = vpack.c.b16 %v916, %v915
        %v932 = vpack.c.b16 %v918, %v917
        %v933 = vpack.c.b16 %v920, %v919
        %v934 = vpack.c.b16 %v922, %v921
        %v935 = vpack.c.b16 %v924, %v923
        %v936 = vpack.c.b16 %v926, %v925
        %v937 = vpack.c.b16 %v928, %v927
        %v938 = vpack.c.b16 %v930, %v929
        %947 = vmatprep.subr.bf16.mxu0 0
        %948 = vmatpush1.bf16.msra.mxu0 %v931
        %949 = vmatprep.subr.bf16.mxu0 0
        %950 = vmatpush1.bf16.msra.mxu0 %v932
        %951 = vmatprep.subr.bf16.mxu0 0
        %952 = vmatpush1.bf16.msra.mxu0 %v933
        %953 = vmatprep.subr.bf16.mxu0 0
        %954 = vmatpush1.bf16.msra.mxu0 %v934
        %955 = vmatprep.subr.bf16.mxu0 0
        %956 = vmatpush1.bf16.msra.mxu0 %v935
        %957 = vmatprep.subr.bf16.mxu0 0
        %958 = vmatpush1.bf16.msra.mxu0 %v936
        %959 = vmatprep.subr.bf16.mxu0 0
        %960 = vmatpush1.bf16.msra.mxu0 %v937
        %961 = vmatprep.subr.bf16.mxu0 0
        %962 = vmatpush1.bf16.msra.mxu0 %v938
        %963 = vmatprep.subr.bf16.mxu0 0
        %964 = vmatpush1.bf16.msra.mxu0 0
        %965 = vmatprep.subr.bf16.mxu0 0
        %966 = vmatpush1.bf16.msra.mxu0 0
        %967 = vmatprep.subr.bf16.mxu0 0
        %968 = vmatpush1.bf16.msra.mxu0 0
        %969 = vmatprep.subr.bf16.mxu0 0
        %970 = vmatpush1.bf16.msra.mxu0 0
        %971 = vmatprep.subr.bf16.mxu0 0
        %972 = vmatpush1.bf16.msra.mxu0 0
        %973 = vmatprep.subr.bf16.mxu0 0
        %974 = vmatpush1.bf16.msra.mxu0 0
        %975 = vmatprep.subr.bf16.mxu0 0
        %976 = vmatpush1.bf16.msra.mxu0 0
        %977 = vmatprep.subr.bf16.mxu0 0
        %978 = vmatpush1.bf16.msra.mxu0 0
        %979 = vmatprep.mubr.bf16.mxu0 0
        %980 = vmatmul.mubr.bf16.gmra.mrb[0].mxu0 %v879
        %v981 = vpop.f32.mrb[0].mxu0
        %v982 = vadd.f32 0.0, %v981
        %v983 = vpop.f32.mrb[0].mxu0
        %v984 = vpop.f32.mrb[0].mxu0
        %v985 = vadd.f32 0.0, %v984
        %v986 = vpop.f32.mrb[0].mxu0
        %987 = vmatprep.mubr.bf16.mxu0 0
        %988 = vmatmul.mubr.bf16.gmra.mrb[0].mxu0 %v880
        %v989 = vpop.f32.mrb[0].mxu0
        %v990 = vadd.f32 0.0, %v989
        %v991 = vpop.f32.mrb[0].mxu0
        %v992 = vpop.f32.mrb[0].mxu0
        %v993 = vadd.f32 0.0, %v992
        %v994 = vpop.f32.mrb[0].mxu0
        %995 = vmatprep.mubr.bf16.mxu0 0
        %996 = vmatmul.mubr.bf16.gmra.mrb[0].mxu0 %v881
        %v997 = vpop.f32.mrb[0].mxu0
        %v998 = vadd.f32 0.0, %v997
        %v999 = vpop.f32.mrb[0].mxu0
        %v1000 = vpop.f32.mrb[0].mxu0
        %v1001 = vadd.f32 0.0, %v1000
        %v1002 = vpop.f32.mrb[0].mxu0
        %1003 = vmatprep.mubr.bf16.mxu0 0
        %1004 = vmatmul.mubr.bf16.gmra.mrb[0].mxu0 %v882
        %v1005 = vpop.f32.mrb[0].mxu0
        %v1006 = vadd.f32 0.0, %v1005
        %v1007 = vpop.f32.mrb[0].mxu0
        %v1008 = vpop.f32.mrb[0].mxu0
        %v1009 = vadd.f32 0.0, %v1008
        %v1010 = vpop.f32.mrb[0].mxu0
        %1011 = vdwg.mxu0
        %v1012 = vpack.c.bf16 %v985, %v982
        %v1013 = vpack.c.bf16 %v993, %v990
        %v1014 = vpack.c.bf16 %v1001, %v998
        %v1015 = vpack.c.bf16 %v1009, %v1006
        %v1020 = vunpack.c.l.b16 %v1012
        %v1021 = vunpack.c.h.b16 %v1012
        %v1022 = vunpack.c.l.b16 %v1013
        %v1023 = vunpack.c.h.b16 %v1013
        %v1024 = vunpack.c.l.b16 %v1014
        %v1025 = vunpack.c.h.b16 %v1014
        %v1026 = vunpack.c.l.b16 %v1015
        %v1027 = vunpack.c.h.b16 %v1015
        %v1028 = vpack.c.b16 %v1020, %v1020
        %v1029 = vpack.c.b16 %v1021, %v1021
        %v1030 = vpack.c.b16 %v1022, %v1022
        %v1031 = vpack.c.b16 %v1023, %v1023
        %v1032 = vpack.c.b16 %v1024, %v1024
        %v1033 = vpack.c.b16 %v1025, %v1025
        %v1034 = vpack.c.b16 %v1026, %v1026
        %v1035 = vpack.c.b16 %v1027, %v1027
        %1044 = vst [vmem:[%s230] sm:$0xf] %v1028
        %1045 = vst [vmem:[%s230 + $0x4] sm:$0xf] %v1029
        %1046 = vst [vmem:[%s230 + $0x8] sm:$0xf] %v1030
        %1047 = vst [vmem:[%s230 + $0xc] sm:$0xf] %v1031
        %1048 = vst [vmem:[%s230 + $0x10] sm:$0xf] %v1032
        %1049 = vst [vmem:[%s230 + $0x14] sm:$0xf] %v1033
        %1050 = vst [vmem:[%s230 + $0x18] sm:$0xf] %v1034
        %1051 = vst [vmem:[%s230 + $0x1c] sm:$0xf] %v1035
        %s1052 = sand.u32 %s119, 1
        %s1053 = scalar_lea.sflag [#allocation4], %s1052
        %s1054 = sand.u32 %s119, 1
        %s1055 = smul.addr %s1054, 32
        %s1056 = scalar_lea.vmem [#allocation7], %s1055
        // Predicated region
        $region45: #{tpu_custom_call.1} parent=35 // pred_check
          %p1057 = pneg %p129
        $region46: #{tpu_custom_call.1} parent=35 // pred_check_branch
          %1059 = sbr.rel (%p1057) target = $region48
        $region47: #{tpu_custom_call.1} parent=35 // pred_region
          %s1060 = smul.u32 8, %s22
          %s1062 = ssub.s32 512, 512
          %1063 = vsyncadd %s1053, %s1062
          %s1064 = smul.addr %s1060, 64
          %s1065 = scalar_lea.hbm %s4, %s1064
          %s1066 = sshll.u32 %s1056, 4
          %s1067 = int_to_ptr.vmem [resolvable:$true] %s1066
          %1072 = dma.vmem_to_hbm [thread:$0]  %s1067, 512, %s1065, %s1053, 64, 64, 4
        $region48: #{tpu_custom_call.1} parent=35 // pred_fallthru
          _
      $region36: #{tpu_custom_call.1} parent=5 // pred_fallthru
        _
      %p1073 = scmp.le.s32.totalorder 2, %s17
      // Predicated region
      $region49: #{tpu_custom_call.1} parent=5 // pred_check
        %p1074 = pneg %p1073
      $region50: #{tpu_custom_call.1} parent=5 // pred_check_branch
        %1076 = sbr.rel (%p1074) target = $region52
      $region51: #{tpu_custom_call.1} parent=5 // pred_region
        %s1077 = ssub.s32 %s17, 2
        // Predicated region
        $region53: #{tpu_custom_call.1} parent=51 // pred_check
          %p1078 = pneg %p135
        $region54: #{tpu_custom_call.1} parent=51 // pred_check_branch
          %1080 = sbr.rel (%p1078) target = $region56
        $region55: #{tpu_custom_call.1} parent=51 // pred_region
          %s1081 = sand.u32 %s120, 1
          %s1082 = scalar_lea.sflag [#allocation4], %s1081
          %s1083 = sand.u32 %s120, 1
          %s1084 = smul.addr %s1083, 32
          %s1085 = scalar_lea.vmem [#allocation7], %s1084
          %1086 = dma.done %s1082, 512
        $region56: #{tpu_custom_call.1} parent=51 // pred_fallthru
          _
      $region52: #{tpu_custom_call.1} parent=5 // pred_fallthru
        _
    $region6: #{tpu_custom_call.1} parent=1 // loop_footer
      %s21 = sadd.s32 1, %s17
    $region7: #{tpu_custom_call.1} parent=1 // loop_footer_branch
      %16 = sbr.rel target = $region3
    $region8: #{tpu_custom_call.1} parent=1 // loop_exit
      _
    %1087 = vsyncpa [#allocation3], 1
    %s1088 = scalar_lea.sflag [#allocation3], 1
    %1089 = vsyncpa %s1088, 1
    %1090 = vsyncpa [#allocation6], 1
    %1091 = vsyncpa [#allocation4], 1
    %s1092 = scalar_lea.sflag [#allocation4], 1
    %1093 = vsyncpa %s1092, 1

</llo_original>
